<compile_context>
chip_gen: v7x
topology: tpu7x:2x2x1
jax: 0.10.0
libtpu: 0.0.40
codegen_flags: <defaults>
</compile_context>

<pallas_src>
import functools

import jax
import jax.numpy as jnp
import numpy as np
from jax.experimental import pallas as pl
from jax.experimental.pallas import tpu as pltpu


def _round_up(v, m):
    return (v + m - 1) // m * m


def _vmem_budget_bytes():
    """(per-step working-set budget, scoped vmem limit) — generation aware."""
    try:
        kind = jax.devices()[0].device_kind.lower()
    except Exception:  # pragma: no cover
        kind = ""
    if ("v5" in kind) or ("v6" in kind):          # 128 MiB VMEM per TensorCore
        return 48 * 1024 * 1024, 80 * 1024 * 1024
    # v7x (64 MiB / TensorCore) and unknown chips: stay conservative.
    return 14 * 1024 * 1024, 40 * 1024 * 1024


def _choose_tiling(n):
    """Pick (row tile TM, padded node count N_pad, scoped vmem limit)."""
    budget, vmem_limit = _vmem_budget_bytes()
    n128 = _round_up(max(n, 1), 128)
    # Per grid step the kernel streams [N_pad, TM] arrays: int8 adj tile
    # (double buffered) + a few f32 temporaries + the bf16 `e` matmul operand
    # ~= 20 bytes / element.  Residents: lane-padded [N_pad, 1] s_dst column
    # (f32, double buffered) + bf16 x_aug^T ~= 1400 bytes / node.
    per_elem = 20
    resident = 1400 * n128 + (1 << 20)
    avail = max(budget - resident, per_elem * 128 * n128)
    tm = (avail // (per_elem * n128)) // 128 * 128
    tm = int(min(max(tm, 128), 2048, n128))
    if n >= 256:
        # Keep >= 2 row tiles so the "parallel" row axis can feed both v7x
        # TensorCores (harmless on single-TC v5e/v6e).
        tm = min(tm, _round_up(_round_up(n, 128) // 2, 128))
    n_pad = _round_up(n, tm)
    return tm, n_pad, vmem_limit


@functools.partial(jax.jit, static_argnames=("tm", "n_pad", "vmem_limit"))
def _forward_impl(x, edge, w, a_src_dst, *, tm, n_pad, vmem_limit):
    N, F = x.shape
    H = w.shape[0]
    Fp = F + 1
    num_tiles = n_pad // tm

    # ---- O(N*F + H*N + E) glue in plain JAX/XLA ---------------------------
    w2 = w[:, 0, :]                                           # [H, F]
    a_src = a_src_dst[:, :F, 0] * w2                          # [H, F] (diag w folded)
    a_dst = a_src_dst[:, F:, 0] * w2                          # [H, F]

    # Per-head, per-node attention scores, hoisted out of the kernel.
    s_src = jnp.einsum("nf,hf->hn", x, a_src,
                       precision=jax.lax.Precision.HIGHEST)   # [H, N]
    s_dst = jnp.einsum("nf,hf->hn", x, a_dst,
                       precision=jax.lax.Precision.HIGHEST)   # [H, N]
    if n_pad != N:
        pad = ((0, 0), (0, n_pad - N))
        s_src = jnp.pad(s_src, pad)
        s_dst = jnp.pad(s_dst, pad)
    s_src = s_src[:, None, :]                                 # [H, 1, N_pad] (lane major)
    s_dst = s_dst[:, :, None]                                 # [H, N_pad, 1] (sublane major)

    # Features augmented with a ones column (so the aggregate matmul also
    # produces the rowsum), transposed for a lane-dense MXU output, in bf16.
    x_aug = jnp.concatenate([x, jnp.ones((N, 1), x.dtype)], axis=1)     # [N, Fp]
    if n_pad != N:
        x_aug = jnp.pad(x_aug, ((0, n_pad - N), (0, 0)))
    x_aug_t = x_aug.T.astype(jnp.bfloat16)                              # [Fp, N_pad]

    w_col = w2[:, :, None]                                              # [H, F, 1]

    # Transposed adjacency duplicate counts, scattered directly into int8 and
    # pre-blocked as [num_tiles, N_pad, TM] so every tile DMA is contiguous.
    # adjT[v, u] = #edges (u -> v); exact for per-pair counts <= 127.
    src = edge[0].astype(jnp.int32)
    dst = edge[1].astype(jnp.int32)
    adj_t = (jnp.zeros((num_tiles, n_pad, tm), jnp.int8)
                .at[src // tm, dst, src % tm]
                .add(jnp.ones(src.shape, jnp.int8)))

    # ---- Pallas kernel ----------------------------------------------------
    def kernel(xt_ref, ssrc_ref, sdst_ref, w_ref, adjt_ref, out_ref):
        # scores^T[v, u] = s_src[u] + s_dst[v]  (v = source node on sublanes,
        #                                        u = output node on lanes)
        s = ssrc_ref[0] + sdst_ref[0]                          # [N_pad, TM] f32
        # exp(-LeakyReLU_0.2(s)) == exp(min(-s, -0.2*s)); clamp at 80 so a
        # non-edge lane can never reach inf (inf * 0 adjacency == NaN).
        expo = jnp.minimum(jnp.minimum(-s, -0.2 * s), 80.0)
        e = (jnp.exp(expo) * adjt_ref[0].astype(jnp.float32)).astype(jnp.bfloat16)
        # One lane-dense MXU matmul: rows 0..F-1 = aggregate, row F = rowsum.
        agg = jnp.dot(xt_ref[...], e,
                      preferred_element_type=jnp.float32)      # [Fp, TM]
        inv = 1.0 / agg[F:Fp, :]                               # [1, TM]
        out_ref[0] = agg[:F, :] * w_ref[0] * inv               # diag weight + normalize

    if num_tiles >= 2:
        grid = (num_tiles, H)            # heads innermost -> adj tile reused across heads
        to_ih = lambda a, b: (a, b)      # grid indices -> (row_tile, head)
    else:
        grid = (H, num_tiles)            # single row tile: heads on the parallel axis
        to_ih = lambda a, b: (b, a)
    dim_sems = ("parallel", "arbitrary")

    def _spec(block, f):
        return pl.BlockSpec(block, lambda a, b: f(*to_ih(a, b)))

    out_t = pl.pallas_call(
        kernel,
        out_shape=jax.ShapeDtypeStruct((H, F, n_pad), jnp.float32),
        grid_spec=pltpu.PrefetchScalarGridSpec(
            num_scalar_prefetch=0,
            grid=grid,
            in_specs=[
                _spec((Fp, n_pad),    lambda i, h: (0, 0)),      # x_aug^T (bf16 resident)
                _spec((1, 1, tm),     lambda i, h: (h, 0, i)),   # s_src row tile
                _spec((1, n_pad, 1),  lambda i, h: (h, 0, 0)),   # s_dst column
                _spec((1, F, 1),      lambda i, h: (h, 0, 0)),   # diag weight column
                _spec((1, n_pad, tm), lambda i, h: (i, 0, 0)),   # adj^T tile (h-independent)
            ],
            out_specs=_spec((1, F, tm), lambda i, h: (h, 0, i)),
        ),
        compiler_params=pltpu.CompilerParams(
            dimension_semantics=dim_sems,
            vmem_limit_bytes=vmem_limit,
        ),
    )(x_aug_t, s_src, s_dst, w_col, adj_t)

    # Back to the module's [H, N, F] layout (cheap wrapper-side transpose).
    return jnp.transpose(out_t[:, :, :N], (0, 2, 1))


def kecg_multihead_graph_attention(x, edge, w, a_src_dst):
    """Forward of KECGMultiHeadGraphAttention (diag=True, bias=None, eval).

    x:          [N, F]      float32 node features
    edge:       [2, E]      int32 edge list (row 0 = src, row 1 = dst)
    w:          [H, 1, F]   diagonal per-head weights
    a_src_dst:  [H, 2F, 1]  per-head attention vectors (src half | dst half)
    returns:    [H, N, F]   float32
    """
    N, _ = x.shape
    tm, n_pad, vmem_limit = _choose_tiling(N)
    return _forward_impl(x, edge, w, a_src_dst,
                         tm=tm, n_pad=n_pad, vmem_limit=vmem_limit)


def _reference(x, edge, w, a_src_dst):
    """Float64 numpy reference mirroring the torch forward (diag=True, eval)."""
    x = np.asarray(x, np.float64)
    edge = np.asarray(edge)
    w = np.asarray(w, np.float64)
    a = np.asarray(a_src_dst, np.float64)
    N, F = x.shape
    H = w.shape[0]
    adj = np.zeros((N, N), np.float64)
    np.add.at(adj, (edge[0], edge[1]), 1.0)          # duplicate edges sum
    outs = []
    for i in range(H):
        h = x * w[i]                                  # [N, F]
        s_src = h @ a[i, :F, 0]                       # [N]
        s_dst = h @ a[i, F:, 0]                       # [N]
        scores = s_src[:, None] + s_dst[None, :]
        lrelu = np.where(scores > 0, scores, 0.2 * scores)
        e = np.exp(-lrelu) * adj
        outs.append((e @ h) / e.sum(axis=1, keepdims=True))
    return np.stack(outs, axis=0)


if __name__ == "__main__":
    # Small shapes consistent with the module: n_head=2, N=64 nodes, f_in=f_out=32.
    H, N, F, E = 2, 64, 32, 256

    key = jax.random.PRNGKey(0)
    kx, kw, ka, ks, kd = jax.random.split(key, 5)

    x = jax.random.normal(kx, (N, F), dtype=jnp.float32)

    # Deterministic "xavier_uniform"-style init for parameters.
    w_bound = float(np.sqrt(6.0 / (1 + F)))
    w = jax.random.uniform(kw, (H, 1, F), minval=-w_bound, maxval=w_bound,
                           dtype=jnp.float32)
    a_bound = float(np.sqrt(6.0 / (2 * F + 1)))
    a_src_dst = jax.random.uniform(ka, (H, 2 * F, 1), minval=-a_bound, maxval=a_bound,
                                   dtype=jnp.float32)

    # Random edges plus self-loops (keeps every row non-empty -> finite outputs).
    rnd_src = jax.random.randint(ks, (E,), 0, N, dtype=jnp.int32)
    rnd_dst = jax.random.randint(kd, (E,), 0, N, dtype=jnp.int32)
    self_loop = jnp.arange(N, dtype=jnp.int32)
    edge = jnp.stack([jnp.concatenate([rnd_src, self_loop]),
                      jnp.concatenate([rnd_dst, self_loop])], axis=0)   # [2, E+N]

    out = kecg_multihead_graph_attention(x, edge, w, a_src_dst)
    out = jax.block_until_ready(out)

    ref = _reference(x, edge, w, a_src_dst)
    # bf16 MXU operands -> relaxed tolerance (review-approved trade-off).
    np.testing.assert_allclose(np.asarray(out), ref, rtol=5e-2, atol=1e-2)

    print("KERNEL_OK")
</pallas_src>

<mosaic_0001>
module attributes {stable_mosaic.version = 11 : i64} {
  func.func @kernel(%arg0: i32, %arg1: i32, %arg2: memref<33x128xbf16, #tpu.memory_space<vmem>>, %arg3: memref<1x1x128xf32, #tpu.memory_space<vmem>>, %arg4: memref<1x128x1xf32, #tpu.memory_space<vmem>>, %arg5: memref<1x32x1xf32, #tpu.memory_space<vmem>>, %arg6: memref<1x128x128xi8, #tpu.memory_space<vmem>>, %arg7: memref<1x32x128xf32, #tpu.memory_space<vmem>>) attributes {dimension_semantics = [#tpu.dimension_semantics<parallel>, #tpu.dimension_semantics<arbitrary>], iteration_bounds = array<i64: 2, 1>, scalar_prefetch = 0 : i64, scratch_operands = 0 : i64, tpu.core_type = #tpu.core_type<tc>, window_params = [{pipeline_mode = #tpu.pipeline_mode<synchronous>, transform_indices = @transform_0, window_bounds = array<i64: 33, 128>}, {transform_indices = @transform_1, window_bounds = array<i64: 1, 1, 128>}, {transform_indices = @transform_2, window_bounds = array<i64: 1, 128, 1>}, {transform_indices = @transform_3, window_bounds = array<i64: 1, 32, 1>}, {transform_indices = @transform_4, window_bounds = array<i64: 1, 128, 128>}, {transform_indices = @transform_5, window_bounds = array<i64: 1, 32, 128>}]} {
    %c0 = arith.constant 0 : index
    %c0_0 = arith.constant 0 : index
    %c0_1 = arith.constant 0 : index
    %0 = vector.load %arg3[%c0, %c0_0, %c0_1] : memref<1x1x128xf32, #tpu.memory_space<vmem>>, vector<1x1x128xf32>
    %1 = vector.shape_cast %0 : vector<1x1x128xf32> to vector<1x128xf32>
    %c0_2 = arith.constant 0 : index
    %c0_3 = arith.constant 0 : index
    %c0_4 = arith.constant 0 : index
    %2 = vector.load %arg4[%c0_2, %c0_3, %c0_4] : memref<1x128x1xf32, #tpu.memory_space<vmem>>, vector<1x128x1xf32>
    %3 = vector.shape_cast %2 : vector<1x128x1xf32> to vector<128x1xf32>
    %4 = vector.broadcast %1 : vector<1x128xf32> to vector<128x128xf32>
    %5 = vector.broadcast %3 : vector<128x1xf32> to vector<128x128xf32>
    %6 = arith.addf %4, %5 : vector<128x128xf32>
    %cst = arith.constant 0.000000e+00 : f32
    %7 = vector.broadcast %cst : f32 to vector<128x128xf32>
    %8 = arith.subf %7, %6 : vector<128x128xf32>
    %cst_5 = arith.constant -2.000000e-01 : f32
    %9 = vector.broadcast %cst_5 : f32 to vector<128x128xf32>
    %10 = arith.mulf %9, %6 : vector<128x128xf32>
    %11 = arith.minimumf %8, %10 : vector<128x128xf32>
    %cst_6 = arith.constant 8.000000e+01 : f32
    %12 = vector.broadcast %cst_6 : f32 to vector<128x128xf32>
    %13 = arith.minimumf %11, %12 : vector<128x128xf32>
    %14 = math.exp %13 : vector<128x128xf32>
    %c0_7 = arith.constant 0 : index
    %c0_8 = arith.constant 0 : index
    %c0_9 = arith.constant 0 : index
    %15 = vector.load %arg6[%c0_7, %c0_8, %c0_9] : memref<1x128x128xi8, #tpu.memory_space<vmem>>, vector<1x128x128xi8>
    %16 = vector.shape_cast %15 : vector<1x128x128xi8> to vector<128x128xi8>
    %17 = arith.sitofp %16 : vector<128x128xi8> to vector<128x128xf32>
    %18 = arith.mulf %14, %17 : vector<128x128xf32>
    %19 = arith.truncf %18 : vector<128x128xf32> to vector<128x128xbf16>
    %c0_10 = arith.constant 0 : index
    %c0_11 = arith.constant 0 : index
    %20 = vector.load %arg2[%c0_10, %c0_11] : memref<33x128xbf16, #tpu.memory_space<vmem>>, vector<33x128xbf16>
    %cst_12 = arith.constant dense<0.000000e+00> : vector<33x128xf32>
    %21 = tpu.matmul %20, %19, %cst_12 {dimension_numbers = #tpu.dot_dimension_numbers<[1], [0], [0], [1], [0, 0, 1, 1], [], []>} : vector<33x128xbf16>, vector<128x128xbf16>, vector<33x128xf32> -> vector<33x128xf32>
    %22 = vector.extract_strided_slice %21 {offsets = [32, 0], sizes = [1, 128], strides = [1, 1]} : vector<33x128xf32> to vector<1x128xf32>
    %cst_13 = arith.constant 1.000000e+00 : f32
    %23 = vector.broadcast %cst_13 : f32 to vector<1x128xf32>
    %24 = arith.divf %23, %22 : vector<1x128xf32>
    %25 = vector.extract_strided_slice %21 {offsets = [0, 0], sizes = [32, 128], strides = [1, 1]} : vector<33x128xf32> to vector<32x128xf32>
    %c0_14 = arith.constant 0 : index
    %c0_15 = arith.constant 0 : index
    %c0_16 = arith.constant 0 : index
    %26 = vector.load %arg5[%c0_14, %c0_15, %c0_16] : memref<1x32x1xf32, #tpu.memory_space<vmem>>, vector<1x32x1xf32>
    %27 = vector.shape_cast %26 : vector<1x32x1xf32> to vector<32x1xf32>
    %28 = vector.broadcast %27 : vector<32x1xf32> to vector<32x128xf32>
    %29 = arith.mulf %25, %28 : vector<32x128xf32>
    %30 = vector.broadcast %24 : vector<1x128xf32> to vector<32x128xf32>
    %31 = arith.mulf %29, %30 : vector<32x128xf32>
    %c0_17 = arith.constant 0 : index
    %c0_18 = arith.constant 0 : index
    %c0_19 = arith.constant 0 : index
    %32 = vector.load %arg7[%c0_17, %c0_18, %c0_19] : memref<1x32x128xf32, #tpu.memory_space<vmem>>, vector<1x32x128xf32>
    %33 = vector.shape_cast %32 : vector<1x32x128xf32> to vector<32x128xf32>
    %34 = vector.shape_cast %31 : vector<32x128xf32> to vector<1x32x128xf32>
    tpu.vector_store %arg7[%c0_17, %c0_18, %c0_19], %34 {strides = array<i32>} : memref<1x32x128xf32, #tpu.memory_space<vmem>>, vector<1x32x128xf32>,
    return
  }
  func.func @transform_0(%arg0: i32, %arg1: i32) -> (i32, i32) {
    %c0_i32 = arith.constant 0 : i32
    %c0_i32_0 = arith.constant 0 : i32
    %c0_i32_1 = arith.constant 0 : i32
    return %c0_i32, %c0_i32_0 : i32, i32
  }
  func.func @transform_1(%arg0: i32, %arg1: i32) -> (i32, i32, i32) {
    %c0_i32 = arith.constant 0 : i32
    %c0_i32_0 = arith.constant 0 : i32
    return %arg0, %c0_i32, %arg1 : i32, i32, i32
  }
  func.func @transform_2(%arg0: i32, %arg1: i32) -> (i32, i32, i32) {
    %c0_i32 = arith.constant 0 : i32
    %c0_i32_0 = arith.constant 0 : i32
    %c0_i32_1 = arith.constant 0 : i32
    return %arg0, %c0_i32, %c0_i32_0 : i32, i32, i32
  }
  func.func @transform_3(%arg0: i32, %arg1: i32) -> (i32, i32, i32) {
    %c0_i32 = arith.constant 0 : i32
    %c0_i32_0 = arith.constant 0 : i32
    %c0_i32_1 = arith.constant 0 : i32
    return %arg0, %c0_i32, %c0_i32_0 : i32, i32, i32
  }
  func.func @transform_4(%arg0: i32, %arg1: i32) -> (i32, i32, i32) {
    %c0_i32 = arith.constant 0 : i32
    %c0_i32_0 = arith.constant 0 : i32
    %c0_i32_1 = arith.constant 0 : i32
    return %arg1, %c0_i32, %c0_i32_0 : i32, i32, i32
  }
  func.func @transform_5(%arg0: i32, %arg1: i32) -> (i32, i32, i32) {
    %c0_i32 = arith.constant 0 : i32
    %c0_i32_0 = arith.constant 0 : i32
    return %arg0, %c0_i32, %arg1 : i32, i32, i32
  }
}

</mosaic_0001>

<llo_original>
// kernel: _forward_impl.1
$region0: #{_forward_impl.1}
  #allocation0 [shape = 'u32[]', space=smem, size = 0x4, offset = 0x4, fixed_abs, tag = 'smem constant byte address 0x4 - core index']
  #allocation1 [shape = 'u32[144,128]{1,0:T(1,128)}', space=vmem, size = 0x12000, scoped, tag = 'internal scratch']
  %s0 = inlined_call_operand.vmem [shape: bf16[33,128], index: 0, kind: input, shape index: {}]
  %s1 = inlined_call_operand.vmem [shape: f32[2,1,128], index: 1, kind: input, shape index: {}]
  %s2 = inlined_call_operand.vmem [shape: f32[2,128,1], index: 2, kind: input, shape index: {}]
  %s3 = inlined_call_operand.vmem [shape: f32[2,32,1], index: 3, kind: input, shape index: {}]
  %s4 = inlined_call_operand.vmem [shape: s8[1,128,128], index: 4, kind: input, shape index: {}]
  %s5 = inlined_call_operand.vmem [shape: f32[2,32,128], index: 5, kind: output, shape index: {}]
  %s6 = sld [smem:[#allocation0]]
  $region53: #{_forward_impl.1} parent=0
    _
  %s8 = ssub.s32 1, %s6
  %s9 = scalar_select 0, %s8, %s6
  loop: start=0, step=1, limit=4
  $region2: #{_forward_impl.1} parent=0 // loop_pre_header
    _
  $region3: #{_forward_impl.1} parent=0 // loop_header
    %s11 = sphi 0, %s15
    %p12 = scmp.ge.s32.totalorder %s11, 4
    %s18 = sphi 0, %s30
    %s19 = sphi 0, %s26
    %s20 = sphi 0, %s18
    %s21 = sphi 0, %s19
    %s22 = sphi 0, %s20
    %s23 = sphi 0, %s21
    %s31 = sphi 0, %s31
    %s33 = sphi 0, %s31
    %s34 = sphi 0, %s33
    %s48 = sphi 0, %s34
    %s56 = sphi 0, %s58
    %s59 = sphi 0, %s56
    %s60 = sphi 0, %s59
    %s76 = sphi 0, %s60
    %s82 = sphi 0, %s84
    %s85 = sphi 0, %s82
    %s86 = sphi 0, %s85
    %s102 = sphi 0, %s86
    %s108 = sphi 0, %s110
    %s111 = sphi 0, %s108
    %s112 = sphi 0, %s111
    %s128 = sphi 0, %s112
    %s134 = sphi 0, %s136
    %s137 = sphi 0, %s134
    %s138 = sphi 0, %s137
    %s154 = sphi 0, %s138
    %s162 = sphi 0, %s164
    %s165 = sphi 0, %s162
    %s166 = sphi 0, %s165
    %s182 = sphi 0, %s166
  $region4: #{_forward_impl.1} parent=0 // loop_header_branch
    %14 = sbr.rel (%p12) target = $region8
  $region5: #{_forward_impl.1} parent=0 // loop_body
    %s16 = ssub.s32 %s11, 1
    %s17 = ssub.s32 %s11, 2
    %s24 = sadd.s32 1, %s19
    %p25 = scmp.ge.s32.totalorder %s24, 1
    %s26 = scalar_select %p25, 0, %s24
    %s27 = sadd.s32 1, %s18
    %s28 = scalar_select %p25, %s27, %s18
    %p29 = scmp.ge.s32.totalorder %s28, 2
    %s30 = scalar_select %p29, 0, %s28
    %s32 = sadd.s32 %s31, 1
    %p35 = scmp.eq.s32.totalorder %s11, 1
    %p36 = scmp.ne.s32.totalorder %s31, %s33
    %p37 = scmp.eq.s32.totalorder %s11, 0
    %p38 = por %p36, %p37
    %p39 = scmp.ne.s32.totalorder %s31, %s33
    %p40 = scmp.eq.s32.totalorder %s16, 1
    %p41 = por %p39, %p40
    %p42 = scmp.ne.s32.totalorder %s33, %s34
    %p43 = scmp.eq.s32.totalorder %s16, 0
    %p44 = por %p42, %p43
    %p45 = scmp.ne.s32.totalorder %s33, %s34
    %p46 = scmp.eq.s32.totalorder %s17, 1
    %p47 = por %p45, %p46
    %p49 = scmp.ne.s32.totalorder %s34, %s48
    %p50 = scmp.eq.s32.totalorder %s17, 0
    %p51 = por %p49, %p50
    %s52 = ssub.s32 %s18, %s30
    %s53 = ssub.s32 %s19, %s26
    %s54 = sor.u32 %s52, %s53
    %p55 = scmp.eq.s32.totalorder %s54, 0
    %s57 = sadd.s32 %s56, 1
    %s58 = scalar_select %p55, %s56, %s57
    %p61 = pneg %p55
    %p62 = scmp.eq.s32.totalorder %s11, 1
    %p63 = por %p61, %p62
    %p64 = scmp.ne.s32.totalorder %s56, %s59
    %p65 = scmp.eq.s32.totalorder %s11, 0
    %p66 = por %p64, %p65
    %p67 = scmp.ne.s32.totalorder %s56, %s59
    %p68 = scmp.eq.s32.totalorder %s16, 1
    %p69 = por %p67, %p68
    %p70 = scmp.ne.s32.totalorder %s59, %s60
    %p71 = scmp.eq.s32.totalorder %s16, 0
    %p72 = por %p70, %p71
    %p73 = scmp.ne.s32.totalorder %s59, %s60
    %p74 = scmp.eq.s32.totalorder %s17, 1
    %p75 = por %p73, %p74
    %p77 = scmp.ne.s32.totalorder %s60, %s76
    %p78 = scmp.eq.s32.totalorder %s17, 0
    %p79 = por %p77, %p78
    %s80 = ssub.s32 %s18, %s30
    %p81 = scmp.eq.s32.totalorder %s80, 0
    %s83 = sadd.s32 %s82, 1
    %s84 = scalar_select %p81, %s82, %s83
    %p87 = pneg %p81
    %p88 = scmp.eq.s32.totalorder %s11, 1
    %p89 = por %p87, %p88
    %p90 = scmp.ne.s32.totalorder %s82, %s85
    %p91 = scmp.eq.s32.totalorder %s11, 0
    %p92 = por %p90, %p91
    %p93 = scmp.ne.s32.totalorder %s82, %s85
    %p94 = scmp.eq.s32.totalorder %s16, 1
    %p95 = por %p93, %p94
    %p96 = scmp.ne.s32.totalorder %s85, %s86
    %p97 = scmp.eq.s32.totalorder %s16, 0
    %p98 = por %p96, %p97
    %p99 = scmp.ne.s32.totalorder %s85, %s86
    %p100 = scmp.eq.s32.totalorder %s17, 1
    %p101 = por %p99, %p100
    %p103 = scmp.ne.s32.totalorder %s86, %s102
    %p104 = scmp.eq.s32.totalorder %s17, 0
    %p105 = por %p103, %p104
    %s106 = ssub.s32 %s18, %s30
    %p107 = scmp.eq.s32.totalorder %s106, 0
    %s109 = sadd.s32 %s108, 1
    %s110 = scalar_select %p107, %s108, %s109
    %p113 = pneg %p107
    %p114 = scmp.eq.s32.totalorder %s11, 1
    %p115 = por %p113, %p114
    %p116 = scmp.ne.s32.totalorder %s108, %s111
    %p117 = scmp.eq.s32.totalorder %s11, 0
    %p118 = por %p116, %p117
    %p119 = scmp.ne.s32.totalorder %s108, %s111
    %p120 = scmp.eq.s32.totalorder %s16, 1
    %p121 = por %p119, %p120
    %p122 = scmp.ne.s32.totalorder %s111, %s112
    %p123 = scmp.eq.s32.totalorder %s16, 0
    %p124 = por %p122, %p123
    %p125 = scmp.ne.s32.totalorder %s111, %s112
    %p126 = scmp.eq.s32.totalorder %s17, 1
    %p127 = por %p125, %p126
    %p129 = scmp.ne.s32.totalorder %s112, %s128
    %p130 = scmp.eq.s32.totalorder %s17, 0
    %p131 = por %p129, %p130
    %s132 = ssub.s32 %s19, %s26
    %p133 = scmp.eq.s32.totalorder %s132, 0
    %s135 = sadd.s32 %s134, 1
    %s136 = scalar_select %p133, %s134, %s135
    %p139 = pneg %p133
    %p140 = scmp.eq.s32.totalorder %s11, 1
    %p141 = por %p139, %p140
    %p142 = scmp.ne.s32.totalorder %s134, %s137
    %p143 = scmp.eq.s32.totalorder %s11, 0
    %p144 = por %p142, %p143
    %p145 = scmp.ne.s32.totalorder %s134, %s137
    %p146 = scmp.eq.s32.totalorder %s16, 1
    %p147 = por %p145, %p146
    %p148 = scmp.ne.s32.totalorder %s137, %s138
    %p149 = scmp.eq.s32.totalorder %s16, 0
    %p150 = por %p148, %p149
    %p151 = scmp.ne.s32.totalorder %s137, %s138
    %p152 = scmp.eq.s32.totalorder %s17, 1
    %p153 = por %p151, %p152
    %p155 = scmp.ne.s32.totalorder %s138, %s154
    %p156 = scmp.eq.s32.totalorder %s17, 0
    %p157 = por %p155, %p156
    %s158 = ssub.s32 %s18, %s30
    %s159 = ssub.s32 %s19, %s26
    %s160 = sor.u32 %s158, %s159
    %p161 = scmp.eq.s32.totalorder %s160, 0
    %s163 = sadd.s32 %s162, 1
    %s164 = scalar_select %p161, %s162, %s163
    %p167 = pneg %p161
    %p168 = scmp.eq.s32.totalorder %s11, 1
    %p169 = por %p167, %p168
    %p170 = scmp.ne.s32.totalorder %s162, %s165
    %p171 = scmp.eq.s32.totalorder %s11, 0
    %p172 = por %p170, %p171
    %p173 = scmp.ne.s32.totalorder %s162, %s165
    %p174 = scmp.eq.s32.totalorder %s16, 1
    %p175 = por %p173, %p174
    %p176 = scmp.ne.s32.totalorder %s165, %s166
    %p177 = scmp.eq.s32.totalorder %s16, 0
    %p178 = por %p176, %p177
    %p179 = scmp.ne.s32.totalorder %s165, %s166
    %p180 = scmp.eq.s32.totalorder %s17, 1
    %p181 = por %p179, %p180
    %p183 = scmp.ne.s32.totalorder %s166, %s182
    %p184 = scmp.eq.s32.totalorder %s17, 0
    %p185 = por %p183, %p184
    %p186 = scmp.le.s32.totalorder 1, %s11
    %p187 = scmp.lt.s32.totalorder %s11, 3
    %p188 = pnand %p186, %p187
    %p189 = pneg %p188
    // Predicated region
    $region9: #{_forward_impl.1} parent=5 // pred_check
      _
    $region10: #{_forward_impl.1} parent=5 // pred_check_branch
      %191 = sbr.rel (%p188) target = $region12
    $region11: #{_forward_impl.1} parent=5 // pred_region
      %s192 = ssub.s32 %s11, 1
      // Predicated region
      $region13: #{_forward_impl.1} parent=11 // pred_check
        %p193 = pneg %p44
      $region14: #{_forward_impl.1} parent=11 // pred_check_branch
        %195 = sbr.rel (%p193) target = $region16
      $region15: #{_forward_impl.1} parent=11 // pred_region
        _
      $region16: #{_forward_impl.1} parent=11 // pred_fallthru
        _
      // Predicated region
      $region17: #{_forward_impl.1} parent=11 // pred_check
        %p196 = pneg %p150
      $region18: #{_forward_impl.1} parent=11 // pred_check_branch
        %198 = sbr.rel (%p196) target = $region20
      $region19: #{_forward_impl.1} parent=11 // pred_region
        %p199 = scmp.lt.s32.totalorder %s21, 0
        %s200 = scalar_select %p199, %s21, 0
        %s201 = smul.addr %s200, 16
        %s202 = smul.addr %s201, 2
        %s203 = scalar_lea.vmem %s4, %s202
      $region20: #{_forward_impl.1} parent=11 // pred_fallthru
        _
    $region12: #{_forward_impl.1} parent=5 // pred_fallthru
      _
    %p204 = scmp.lt.s32.totalorder %s11, 2
    // Predicated region
    $region21: #{_forward_impl.1} parent=5 // pred_check
      %p205 = pneg %p204
    $region22: #{_forward_impl.1} parent=5 // pred_check_branch
      %207 = sbr.rel (%p205) target = $region24
    $region23: #{_forward_impl.1} parent=5 // pred_region
      // Predicated region
      $region25: #{_forward_impl.1} parent=23 // pred_check
        %p208 = pneg %p66
      $region26: #{_forward_impl.1} parent=23 // pred_check_branch
        %210 = sbr.rel (%p208) target = $region28
      $region27: #{_forward_impl.1} parent=23 // pred_region
        %p211 = scmp.lt.s32.totalorder %s18, 1
        %s212 = scalar_select %p211, %s18, 1
        %p213 = scmp.lt.s32.totalorder %s19, 0
        %s214 = scalar_select %p213, %s19, 0
        %s215 = sadd.s32 %s214, %s212
        %s216 = scalar_lea.vmem %s1, %s215
      $region28: #{_forward_impl.1} parent=23 // pred_fallthru
        _
      // Predicated region
      $region29: #{_forward_impl.1} parent=23 // pred_check
        %p217 = pneg %p92
      $region30: #{_forward_impl.1} parent=23 // pred_check_branch
        %219 = sbr.rel (%p217) target = $region32
      $region31: #{_forward_impl.1} parent=23 // pred_region
        %p220 = scmp.lt.s32.totalorder %s18, 1
        %s221 = scalar_select %p220, %s18, 1
        %s222 = smul.addr %s221, 16
        %s223 = smul.addr %s222, 8
        %s224 = scalar_lea.vmem %s2, %s223
      $region32: #{_forward_impl.1} parent=23 // pred_fallthru
        _
      // Predicated region
      $region33: #{_forward_impl.1} parent=23 // pred_check
        %p225 = pneg %p118
      $region34: #{_forward_impl.1} parent=23 // pred_check_branch
        %227 = sbr.rel (%p225) target = $region36
      $region35: #{_forward_impl.1} parent=23 // pred_region
        %p228 = scmp.lt.s32.totalorder %s18, 1
        %s229 = scalar_select %p228, %s18, 1
        %s230 = smul.addr %s229, 4
        %s231 = smul.addr %s230, 8
        %s232 = scalar_lea.vmem %s3, %s231
      $region36: #{_forward_impl.1} parent=23 // pred_fallthru
        _
    $region24: #{_forward_impl.1} parent=5 // pred_fallthru
      _
    %p233 = scmp.le.s32.totalorder 1, %s11
    %p234 = scmp.lt.s32.totalorder %s11, 3
    %p235 = pnand %p233, %p234
    %p236 = pneg %p235
    // Predicated region
    $region37: #{_forward_impl.1} parent=5 // pred_check
      _
    $region38: #{_forward_impl.1} parent=5 // pred_check_branch
      %238 = sbr.rel (%p235) target = $region40
    $region39: #{_forward_impl.1} parent=5 // pred_region
      %s239 = ssub.s32 %s11, 1
      %p240 = pneg %p44
      %p241 = pneg %p41
      %p242 = scmp.lt.s32.totalorder %s20, 1
      %s243 = scalar_select %p242, %s20, 1
      %p244 = scmp.lt.s32.totalorder %s21, 0
      %s245 = scalar_select %p244, %s21, 0
      %s246 = sadd.s32 %s245, %s243
      %s247 = scalar_lea.vmem %s1, %s246
      %p248 = pneg %p72
      %p249 = pneg %p69
      %p250 = scmp.lt.s32.totalorder %s20, 1
      %s251 = scalar_select %p250, %s20, 1
      %s252 = smul.addr %s251, 16
      %s253 = smul.addr %s252, 8
      %s254 = scalar_lea.vmem %s2, %s253
      %p255 = pneg %p98
      %p256 = pneg %p95
      %p257 = scmp.lt.s32.totalorder %s20, 1
      %s258 = scalar_select %p257, %s20, 1
      %s259 = smul.addr %s258, 4
      %s260 = smul.addr %s259, 8
      %s261 = scalar_lea.vmem %s3, %s260
      %p262 = pneg %p124
      %p263 = pneg %p121
      %p264 = scmp.lt.s32.totalorder %s21, 0
      %s265 = scalar_select %p264, %s21, 0
      %s266 = smul.addr %s265, 16
      %s267 = smul.addr %s266, 2
      %s268 = scalar_lea.vmem %s4, %s267
      %p269 = pneg %p150
      %p270 = pneg %p147
      %p271 = pneg %p178
      %p272 = pneg %p175
      %p273 = scmp.lt.s32.totalorder %s20, 1
      %s274 = scalar_select %p273, %s20, 1
      %p275 = scmp.lt.s32.totalorder %s21, 0
      %s276 = scalar_select %p275, %s21, 0
      %s277 = smul.addr %s274, 4
      %s278 = sadd.s32 %s276, %s277
      %s279 = smul.addr %s278, 8
      %s280 = scalar_lea.vmem %s5, %s279
      %p281 = scmp.lt.s32.totalorder %s20, 1
      %s282 = scalar_select %p281, %s20, 1
      %p283 = scmp.lt.s32.totalorder %s21, 0
      %s284 = scalar_select %p283, %s21, 0
      %s285 = sadd.s32 %s284, %s282
      %s286 = scalar_lea.vmem %s1, %s285
      %p287 = scmp.lt.s32.totalorder %s20, 1
      %s288 = scalar_select %p287, %s20, 1
      %s289 = smul.addr %s288, 16
      %s290 = smul.addr %s289, 8
      %s291 = scalar_lea.vmem %s2, %s290
      %p292 = scmp.lt.s32.totalorder %s20, 1
      %s293 = scalar_select %p292, %s20, 1
      %s294 = smul.addr %s293, 4
      %s295 = smul.addr %s294, 8
      %s296 = scalar_lea.vmem %s3, %s295
      %p297 = scmp.lt.s32.totalorder %s21, 0
      %s298 = scalar_select %p297, %s21, 0
      %s299 = smul.addr %s298, 16
      %s300 = smul.addr %s299, 2
      %s301 = scalar_lea.vmem %s4, %s300
      %p302 = scmp.lt.s32.totalorder %s20, 1
      %s303 = scalar_select %p302, %s20, 1
      %p304 = scmp.lt.s32.totalorder %s21, 0
      %s305 = scalar_select %p304, %s21, 0
      %s306 = smul.addr %s303, 4
      %s307 = sadd.s32 %s305, %s306
      %s308 = smul.addr %s307, 8
      %s309 = scalar_lea.vmem %s5, %s308
      %v311 = vld [vmem:[%s286] sm:$0x1]
      %v312 = vld [vmem:[%s291] sm:$0xff]
      %v313 = vld [vmem:[%s291 + $0x8] sm:$0xff]
      %v314 = vld [vmem:[%s291 + $0x10] sm:$0xff]
      %v315 = vld [vmem:[%s291 + $0x18] sm:$0xff]
      %v316 = vld [vmem:[%s291 + $0x20] sm:$0xff]
      %v317 = vld [vmem:[%s291 + $0x28] sm:$0xff]
      %v318 = vld [vmem:[%s291 + $0x30] sm:$0xff]
      %v319 = vld [vmem:[%s291 + $0x38] sm:$0xff]
      %v320 = vld [vmem:[%s291 + $0x40] sm:$0xff]
      %v321 = vld [vmem:[%s291 + $0x48] sm:$0xff]
      %v322 = vld [vmem:[%s291 + $0x50] sm:$0xff]
      %v323 = vld [vmem:[%s291 + $0x58] sm:$0xff]
      %v324 = vld [vmem:[%s291 + $0x60] sm:$0xff]
      %v325 = vld [vmem:[%s291 + $0x68] sm:$0xff]
      %v326 = vld [vmem:[%s291 + $0x70] sm:$0xff]
      %v327 = vld [vmem:[%s291 + $0x78] sm:$0xff]
      %v329 = vlaneseq
      %v330 = vshrl.u32 %v329, 7
      %v331 = vsub.s32 0, %v330
      %v332 = vrot.slane %v311, %v331
      %335 = vset.pattern.permute.xlu0 0
      %336 = vperm.xlu0 %335, %v312
      %v337 = vpop.permute.xlu0 %336
      %340 = vset.pattern.permute.xlu0 0
      %341 = vperm.xlu0 %340, %v313
      %v342 = vpop.permute.xlu0 %341
      %345 = vset.pattern.permute.xlu0 0
      %346 = vperm.xlu0 %345, %v314
      %v347 = vpop.permute.xlu0 %346
      %350 = vset.pattern.permute.xlu0 0
      %351 = vperm.xlu0 %350, %v315
      %v352 = vpop.permute.xlu0 %351
      %355 = vset.pattern.permute.xlu0 0
      %356 = vperm.xlu0 %355, %v316
      %v357 = vpop.permute.xlu0 %356
      %360 = vset.pattern.permute.xlu0 0
      %361 = vperm.xlu0 %360, %v317
      %v362 = vpop.permute.xlu0 %361
      %365 = vset.pattern.permute.xlu0 0
      %366 = vperm.xlu0 %365, %v318
      %v367 = vpop.permute.xlu0 %366
      %370 = vset.pattern.permute.xlu0 0
      %371 = vperm.xlu0 %370, %v319
      %v372 = vpop.permute.xlu0 %371
      %375 = vset.pattern.permute.xlu0 0
      %376 = vperm.xlu0 %375, %v320
      %v377 = vpop.permute.xlu0 %376
      %380 = vset.pattern.permute.xlu0 0
      %381 = vperm.xlu0 %380, %v321
      %v382 = vpop.permute.xlu0 %381
      %385 = vset.pattern.permute.xlu0 0
      %386 = vperm.xlu0 %385, %v322
      %v387 = vpop.permute.xlu0 %386
      %390 = vset.pattern.permute.xlu0 0
      %391 = vperm.xlu0 %390, %v323
      %v392 = vpop.permute.xlu0 %391
      %395 = vset.pattern.permute.xlu0 0
      %396 = vperm.xlu0 %395, %v324
      %v397 = vpop.permute.xlu0 %396
      %400 = vset.pattern.permute.xlu0 0
      %401 = vperm.xlu0 %400, %v325
      %v402 = vpop.permute.xlu0 %401
      %405 = vset.pattern.permute.xlu0 0
      %406 = vperm.xlu0 %405, %v326
      %v407 = vpop.permute.xlu0 %406
      %410 = vset.pattern.permute.xlu0 0
      %411 = vperm.xlu0 %410, %v327
      %v412 = vpop.permute.xlu0 %411
      %v414 = vadd.f32 %v332, %v337
      %v415 = vadd.f32 %v332, %v342
      %v416 = vadd.f32 %v332, %v347
      %v417 = vadd.f32 %v332, %v352
      %v418 = vadd.f32 %v332, %v357
      %v419 = vadd.f32 %v332, %v362
      %v420 = vadd.f32 %v332, %v367
      %v421 = vadd.f32 %v332, %v372
      %v422 = vadd.f32 %v332, %v377
      %v423 = vadd.f32 %v332, %v382
      %v424 = vadd.f32 %v332, %v387
      %v425 = vadd.f32 %v332, %v392
      %v426 = vadd.f32 %v332, %v397
      %v427 = vadd.f32 %v332, %v402
      %v428 = vadd.f32 %v332, %v407
      %v429 = vadd.f32 %v332, %v412
      %v430 = vsub.f32 0.0, %v414
      %v431 = vsub.f32 0.0, %v415
      %v432 = vsub.f32 0.0, %v416
      %v433 = vsub.f32 0.0, %v417
      %v434 = vsub.f32 0.0, %v418
      %v435 = vsub.f32 0.0, %v419
      %v436 = vsub.f32 0.0, %v420
      %v437 = vsub.f32 0.0, %v421
      %v438 = vsub.f32 0.0, %v422
      %v439 = vsub.f32 0.0, %v423
      %v440 = vsub.f32 0.0, %v424
      %v441 = vsub.f32 0.0, %v425
      %v442 = vsub.f32 0.0, %v426
      %v443 = vsub.f32 0.0, %v427
      %v444 = vsub.f32 0.0, %v428
      %v445 = vsub.f32 0.0, %v429
      %v446 = vmul.f32 %v414, -0.2
      %v447 = vmul.f32 %v415, -0.2
      %v448 = vmul.f32 %v416, -0.2
      %v449 = vmul.f32 %v417, -0.2
      %v450 = vmul.f32 %v418, -0.2
      %v451 = vmul.f32 %v419, -0.2
      %v452 = vmul.f32 %v420, -0.2
      %v453 = vmul.f32 %v421, -0.2
      %v454 = vmul.f32 %v422, -0.2
      %v455 = vmul.f32 %v423, -0.2
      %v456 = vmul.f32 %v424, -0.2
      %v457 = vmul.f32 %v425, -0.2
      %v458 = vmul.f32 %v426, -0.2
      %v459 = vmul.f32 %v427, -0.2
      %v460 = vmul.f32 %v428, -0.2
      %v461 = vmul.f32 %v429, -0.2
      %v462 = vmin.f32 %v430, %v446
      %v463 = vmin.f32 %v431, %v447
      %v464 = vmin.f32 %v432, %v448
      %v465 = vmin.f32 %v433, %v449
      %v466 = vmin.f32 %v434, %v450
      %v467 = vmin.f32 %v435, %v451
      %v468 = vmin.f32 %v436, %v452
      %v469 = vmin.f32 %v437, %v453
      %v470 = vmin.f32 %v438, %v454
      %v471 = vmin.f32 %v439, %v455
      %v472 = vmin.f32 %v440, %v456
      %v473 = vmin.f32 %v441, %v457
      %v474 = vmin.f32 %v442, %v458
      %v475 = vmin.f32 %v443, %v459
      %v476 = vmin.f32 %v444, %v460
      %v477 = vmin.f32 %v445, %v461
      %v478 = vmin.f32 %v462, 80.0
      %v479 = vmin.f32 %v463, 80.0
      %v480 = vmin.f32 %v464, 80.0
      %v481 = vmin.f32 %v465, 80.0
      %v482 = vmin.f32 %v466, 80.0
      %v483 = vmin.f32 %v467, 80.0
      %v484 = vmin.f32 %v468, 80.0
      %v485 = vmin.f32 %v469, 80.0
      %v486 = vmin.f32 %v470, 80.0
      %v487 = vmin.f32 %v471, 80.0
      %v488 = vmin.f32 %v472, 80.0
      %v489 = vmin.f32 %v473, 80.0
      %v490 = vmin.f32 %v474, 80.0
      %v491 = vmin.f32 %v475, 80.0
      %v492 = vmin.f32 %v476, 80.0
      %v493 = vmin.f32 %v477, 80.0
      %v494 = vmul.f32 %v478, 1.442695
      %v495 = vpow.pop %v494
      %v496 = vmul.f32 %v479, 1.442695
      %v497 = vpow.pop %v496
      %v498 = vmul.f32 %v480, 1.442695
      %v499 = vpow.pop %v498
      %v500 = vmul.f32 %v481, 1.442695
      %v501 = vpow.pop %v500
      %v502 = vmul.f32 %v482, 1.442695
      %v503 = vpow.pop %v502
      %v504 = vmul.f32 %v483, 1.442695
      %v505 = vpow.pop %v504
      %v506 = vmul.f32 %v484, 1.442695
      %v507 = vpow.pop %v506
      %v508 = vmul.f32 %v485, 1.442695
      %v509 = vpow.pop %v508
      %v510 = vmul.f32 %v486, 1.442695
      %v511 = vpow.pop %v510
      %v512 = vmul.f32 %v487, 1.442695
      %v513 = vpow.pop %v512
      %v514 = vmul.f32 %v488, 1.442695
      %v515 = vpow.pop %v514
      %v516 = vmul.f32 %v489, 1.442695
      %v517 = vpow.pop %v516
      %v518 = vmul.f32 %v490, 1.442695
      %v519 = vpow.pop %v518
      %v520 = vmul.f32 %v491, 1.442695
      %v521 = vpow.pop %v520
      %v522 = vmul.f32 %v492, 1.442695
      %v523 = vpow.pop %v522
      %v524 = vmul.f32 %v493, 1.442695
      %v525 = vpow.pop %v524
      %v526 = vld [vmem:[%s301] sm:$0x3]
      %v527 = vld [vmem:[%s301 + $0x2] sm:$0x3]
      %v528 = vld [vmem:[%s301 + $0x4] sm:$0x3]
      %v529 = vld [vmem:[%s301 + $0x6] sm:$0x3]
      %v530 = vld [vmem:[%s301 + $0x8] sm:$0x3]
      %v531 = vld [vmem:[%s301 + $0xa] sm:$0x3]
      %v532 = vld [vmem:[%s301 + $0xc] sm:$0x3]
      %v533 = vld [vmem:[%s301 + $0xe] sm:$0x3]
      %v534 = vld [vmem:[%s301 + $0x10] sm:$0x3]
      %v535 = vld [vmem:[%s301 + $0x12] sm:$0x3]
      %v536 = vld [vmem:[%s301 + $0x14] sm:$0x3]
      %v537 = vld [vmem:[%s301 + $0x16] sm:$0x3]
      %v538 = vld [vmem:[%s301 + $0x18] sm:$0x3]
      %v539 = vld [vmem:[%s301 + $0x1a] sm:$0x3]
      %v540 = vld [vmem:[%s301 + $0x1c] sm:$0x3]
      %v541 = vld [vmem:[%s301 + $0x1e] sm:$0x3]
      %v542 = vunpack.c.0.s8 %v526
      %v543 = vunpack.c.0.s8 %v527
      %v544 = vunpack.c.0.s8 %v528
      %v545 = vunpack.c.0.s8 %v529
      %v546 = vunpack.c.0.s8 %v530
      %v547 = vunpack.c.0.s8 %v531
      %v548 = vunpack.c.0.s8 %v532
      %v549 = vunpack.c.0.s8 %v533
      %v550 = vunpack.c.0.s8 %v534
      %v551 = vunpack.c.0.s8 %v535
      %v552 = vunpack.c.0.s8 %v536
      %v553 = vunpack.c.0.s8 %v537
      %v554 = vunpack.c.0.s8 %v538
      %v555 = vunpack.c.0.s8 %v539
      %v556 = vunpack.c.0.s8 %v540
      %v557 = vunpack.c.0.s8 %v541
      %v558 = vcvt.s32.f32 %v542
      %v559 = vcvt.s32.f32 %v543
      %v560 = vcvt.s32.f32 %v544
      %v561 = vcvt.s32.f32 %v545
      %v562 = vcvt.s32.f32 %v546
      %v563 = vcvt.s32.f32 %v547
      %v564 = vcvt.s32.f32 %v548
      %v565 = vcvt.s32.f32 %v549
      %v566 = vcvt.s32.f32 %v550
      %v567 = vcvt.s32.f32 %v551
      %v568 = vcvt.s32.f32 %v552
      %v569 = vcvt.s32.f32 %v553
      %v570 = vcvt.s32.f32 %v554
      %v571 = vcvt.s32.f32 %v555
      %v572 = vcvt.s32.f32 %v556
      %v573 = vcvt.s32.f32 %v557
      %v574 = vmul.f32 %v495, %v558
      %v575 = vmul.f32 %v497, %v559
      %v576 = vmul.f32 %v499, %v560
      %v577 = vmul.f32 %v501, %v561
      %v578 = vmul.f32 %v503, %v562
      %v579 = vmul.f32 %v505, %v563
      %v580 = vmul.f32 %v507, %v564
      %v581 = vmul.f32 %v509, %v565
      %v582 = vmul.f32 %v511, %v566
      %v583 = vmul.f32 %v513, %v567
      %v584 = vmul.f32 %v515, %v568
      %v585 = vmul.f32 %v517, %v569
      %v586 = vmul.f32 %v519, %v570
      %v587 = vmul.f32 %v521, %v571
      %v588 = vmul.f32 %v523, %v572
      %v589 = vmul.f32 %v525, %v573
      %v590 = vpack.c.bf16 %v575, %v574
      %v591 = vpack.c.bf16 %v577, %v576
      %v592 = vpack.c.bf16 %v579, %v578
      %v593 = vpack.c.bf16 %v581, %v580
      %v594 = vpack.c.bf16 %v583, %v582
      %v595 = vpack.c.bf16 %v585, %v584
      %v596 = vpack.c.bf16 %v587, %v586
      %v597 = vpack.c.bf16 %v589, %v588
      %v598 = vld [vmem:[%s0] sm:$0xf]
      %v599 = vld [vmem:[%s0 + $0x4] sm:$0xf]
      %v600 = vld [vmem:[%s0 + $0x8] sm:$0xf]
      %v601 = vld [vmem:[%s0 + $0xc] sm:$0xf]
      %v602 = vld [vmem:[%s0 + $0x10] sm:$0x1]
      %v608 = vunpack.c.l.b16 %v598
      %v609 = vunpack.c.l.b16 %v599
      %v610 = vunpack.c.l.b16 %v600
      %v611 = vunpack.c.l.b16 %v601
      %v612 = vunpack.c.l.b16 %v602
      %v613 = vpack.c.b16 %v609, %v608
      %v614 = vpack.c.b16 %v611, %v610
      %v615 = vpack.c.b16 %v612, %v612
      %619 = vmatprep.subr.bf16.mxu0 0
      %620 = vmatpush1.bf16.msra.mxu0 %v590
      %621 = vmatprep.subr.bf16.mxu0 0
      %622 = vmatpush1.bf16.msra.mxu0 %v591
      %623 = vmatprep.subr.bf16.mxu0 0
      %624 = vmatpush1.bf16.msra.mxu0 %v592
      %625 = vmatprep.subr.bf16.mxu0 0
      %626 = vmatpush1.bf16.msra.mxu0 %v593
      %627 = vmatprep.subr.bf16.mxu0 0
      %628 = vmatpush1.bf16.msra.mxu0 %v594
      %629 = vmatprep.subr.bf16.mxu0 0
      %630 = vmatpush1.bf16.msra.mxu0 %v595
      %631 = vmatprep.subr.bf16.mxu0 0
      %632 = vmatpush1.bf16.msra.mxu0 %v596
      %633 = vmatprep.subr.bf16.mxu0 0
      %634 = vmatpush1.bf16.msra.mxu0 %v597
      %635 = vmatprep.subr.bf16.mxu0 0
      %636 = vmatpush1.bf16.msra.mxu0 0
      %637 = vmatprep.subr.bf16.mxu0 0
      %638 = vmatpush1.bf16.msra.mxu0 0
      %639 = vmatprep.subr.bf16.mxu0 0
      %640 = vmatpush1.bf16.msra.mxu0 0
      %641 = vmatprep.subr.bf16.mxu0 0
      %642 = vmatpush1.bf16.msra.mxu0 0
      %643 = vmatprep.subr.bf16.mxu0 0
      %644 = vmatpush1.bf16.msra.mxu0 0
      %645 = vmatprep.subr.bf16.mxu0 0
      %646 = vmatpush1.bf16.msra.mxu0 0
      %647 = vmatprep.subr.bf16.mxu0 0
      %648 = vmatpush1.bf16.msra.mxu0 0
      %649 = vmatprep.subr.bf16.mxu0 0
      %650 = vmatpush1.bf16.msra.mxu0 0
      %651 = vmatprep.mubr.bf16.mxu0 0
      %652 = vmatmul.mubr.bf16.gmra.mrb[0].mxu0 %v613
      %v653 = vpop.f32.mrb[0].mxu0
      %v654 = vadd.f32 0.0, %v653
      %v655 = vpop.f32.mrb[0].mxu0
      %v656 = vpop.f32.mrb[0].mxu0
      %v657 = vadd.f32 0.0, %v656
      %v658 = vpop.f32.mrb[0].mxu0
      %659 = vmatprep.mubr.bf16.mxu0 0
      %660 = vmatmul.mubr.bf16.gmra.mrb[0].mxu0 %v614
      %v661 = vpop.f32.mrb[0].mxu0
      %v662 = vadd.f32 0.0, %v661
      %v663 = vpop.f32.mrb[0].mxu0
      %v664 = vpop.f32.mrb[0].mxu0
      %v665 = vadd.f32 0.0, %v664
      %v666 = vpop.f32.mrb[0].mxu0
      %667 = vmatprep.mubr.bf16.mxu0 0
      %668 = vmatmul.mubr.bf16.gmra.mrb[0].mxu0 %v615
      %v669 = vpop.f32.mrb[0].mxu0
      %v670 = vadd.f32 0.0, %v669
      %v671 = vpop.f32.mrb[0].mxu0
      %v672 = vpop.f32.mrb[0].mxu0
      %v673 = vpop.f32.mrb[0].mxu0
      %674 = vdwg.mxu0
      %v675 = vrcp.pop %v670
      %v676 = vmul.f32 1.0, %v675
      %v677 = vld [vmem:[%s296] sm:$0xff]
      %v678 = vld [vmem:[%s296 + $0x8] sm:$0xff]
      %v679 = vld [vmem:[%s296 + $0x10] sm:$0xff]
      %v680 = vld [vmem:[%s296 + $0x18] sm:$0xff]
      %682 = vset.pattern.permute.xlu0 0
      %683 = vperm.xlu0 %682, %v677
      %v684 = vpop.permute.xlu0 %683
      %687 = vset.pattern.permute.xlu0 0
      %688 = vperm.xlu0 %687, %v678
      %v689 = vpop.permute.xlu0 %688
      %692 = vset.pattern.permute.xlu0 0
      %693 = vperm.xlu0 %692, %v679
      %v694 = vpop.permute.xlu0 %693
      %697 = vset.pattern.permute.xlu0 0
      %698 = vperm.xlu0 %697, %v680
      %v699 = vpop.permute.xlu0 %698
      %v701 = vmul.f32 %v654, %v684
      %v702 = vmul.f32 %v657, %v689
      %v703 = vmul.f32 %v662, %v694
      %v704 = vmul.f32 %v665, %v699
      %v705 = vlaneseq
      %v706 = vshrl.u32 %v705, 7
      %v707 = vsub.s32 0, %v706
      %v708 = vrot.slane %v676, %v707
      %v709 = vmul.f32 %v701, %v708
      %v710 = vmul.f32 %v702, %v708
      %v711 = vmul.f32 %v703, %v708
      %v712 = vmul.f32 %v704, %v708
      %713 = vst [vmem:[%s309] sm:$0xff] %v709
      %714 = vst [vmem:[%s309 + $0x8] sm:$0xff] %v710
      %715 = vst [vmem:[%s309 + $0x10] sm:$0xff] %v711
      %716 = vst [vmem:[%s309 + $0x18] sm:$0xff] %v712
      %p717 = scmp.lt.s32.totalorder %s20, 1
      %s718 = scalar_select %p717, %s20, 1
      %p719 = scmp.lt.s32.totalorder %s21, 0
      %s720 = scalar_select %p719, %s21, 0
      %s721 = smul.addr %s718, 4
      %s722 = sadd.s32 %s720, %s721
      %s723 = smul.addr %s722, 8
      %s724 = scalar_lea.vmem %s5, %s723
      // Predicated region
      $region41: #{_forward_impl.1} parent=39 // pred_check
        %p725 = pneg %p175
      $region42: #{_forward_impl.1} parent=39 // pred_check_branch
        %727 = sbr.rel (%p725) target = $region44
      $region43: #{_forward_impl.1} parent=39 // pred_region
        _
      $region44: #{_forward_impl.1} parent=39 // pred_fallthru
        _
    $region40: #{_forward_impl.1} parent=5 // pred_fallthru
      _
    %p728 = scmp.le.s32.totalorder 2, %s11
    // Predicated region
    $region45: #{_forward_impl.1} parent=5 // pred_check
      %p729 = pneg %p728
    $region46: #{_forward_impl.1} parent=5 // pred_check_branch
      %731 = sbr.rel (%p729) target = $region48
    $region47: #{_forward_impl.1} parent=5 // pred_region
      %s732 = ssub.s32 %s11, 2
      // Predicated region
      $region49: #{_forward_impl.1} parent=47 // pred_check
        %p733 = pneg %p181
      $region50: #{_forward_impl.1} parent=47 // pred_check_branch
        %735 = sbr.rel (%p733) target = $region52
      $region51: #{_forward_impl.1} parent=47 // pred_region
        %p736 = scmp.lt.s32.totalorder %s22, 1
        %s737 = scalar_select %p736, %s22, 1
        %p738 = scmp.lt.s32.totalorder %s23, 0
        %s739 = scalar_select %p738, %s23, 0
        %s740 = smul.addr %s737, 4
        %s741 = sadd.s32 %s739, %s740
        %s742 = smul.addr %s741, 8
        %s743 = scalar_lea.vmem %s5, %s742
      $region52: #{_forward_impl.1} parent=47 // pred_fallthru
        _
    $region48: #{_forward_impl.1} parent=5 // pred_fallthru
      _
  $region6: #{_forward_impl.1} parent=0 // loop_footer
    %s15 = sadd.s32 1, %s11
  $region7: #{_forward_impl.1} parent=0 // loop_footer_branch
    %10 = sbr.rel target = $region3
  $region8: #{_forward_impl.1} parent=0 // loop_exit
    _

</llo_original>
